<compile_context>
chip_gen: v6e
topology: v6e:2x2x1
jax: 0.10.0
libtpu: 0.0.40
codegen_flags: <defaults>
</compile_context>

<pallas_src>
import jax
import jax.numpy as jnp
from jax.experimental import pallas as pl
from jax.experimental.pallas import tpu as pltpu


def _round_up(x: int, m: int) -> int:
    return (x + m - 1) // m * m


def ffn_kernel(x_ref, w1_ref, b1_ref, w2_ref, b2_ref, o_ref):
    # Two MXU matmuls (bf16 inputs, f32 accumulation) + bias adds + ReLU,
    # fully fused in VMEM.  Bias adds / ReLU ride the otherwise-idle VPU slots.
    x = x_ref[...]                                              # (tm, C) bf16
    h = jnp.dot(x, w1_ref[...], preferred_element_type=jnp.float32)
    h = jnp.maximum(h + b1_ref[...], 0.0)                       # (tm, H) f32, ReLU
    o = jnp.dot(h.astype(w2_ref.dtype), w2_ref[...],            # bf16 again for MXU
                preferred_element_type=jnp.float32)
    o_ref[...] = (o + b2_ref[...]).astype(o_ref.dtype)          # Dropout(eval) = identity


def feedforward(x, w1, b1, w2, b2, *, tm=256,
                vmem_limit_bytes=64 * 1024 * 1024):
    """x: (B, T, C) -> (B, T, C).  tm is the row tile (tunable; sweep per chip:
    multiples of 128 on v5e, 256 on v6e/v7x)."""
    B, T, C = x.shape
    H = w1.shape[1]
    M = B * T

    compute_dtype = jnp.bfloat16
    x2 = x.reshape(M, C).astype(compute_dtype)
    w1c = w1.astype(compute_dtype)
    w2c = w2.astype(compute_dtype)
    b1_2 = b1.reshape(1, H).astype(jnp.float32)
    b2_2 = b2.reshape(1, C).astype(jnp.float32)

    # Effective row tile: shrink for tiny inputs, then pad M so the grid is exact.
    tm_eff = min(tm, _round_up(M, 8))
    m_pad = _round_up(M, tm_eff)
    if m_pad != M:
        x2 = jnp.pad(x2, ((0, m_pad - M), (0, 0)))
    grid_m = m_pad // tm_eff

    out_dtype = x.dtype
    cost = pl.CostEstimate(
        flops=4 * m_pad * C * H,          # two matmuls, 2 flops/MAC each
        transcendentals=0,
        bytes_accessed=(x2.size * x2.dtype.itemsize
                        + w1c.size * w1c.dtype.itemsize
                        + w2c.size * w2c.dtype.itemsize
                        + b1_2.size * 4 + b2_2.size * 4
                        + m_pad * C * jnp.dtype(out_dtype).itemsize),
    )

    out = pl.pallas_call(
        ffn_kernel,
        out_shape=jax.ShapeDtypeStruct((m_pad, C), out_dtype),
        grid_spec=pltpu.PrefetchScalarGridSpec(
            num_scalar_prefetch=0,
            grid=(grid_m,),
            in_specs=[
                pl.BlockSpec((tm_eff, C), lambda i: (i, 0)),   # x row tile (pipelined)
                pl.BlockSpec((C, H), lambda i: (0, 0)),        # W1 resident (constant block)
                pl.BlockSpec((1, H), lambda i: (0, 0)),        # b1 resident
                pl.BlockSpec((H, C), lambda i: (0, 0)),        # W2 resident
                pl.BlockSpec((1, C), lambda i: (0, 0)),        # b2 resident
            ],
            out_specs=pl.BlockSpec((tm_eff, C), lambda i: (i, 0)),
        ),
        compiler_params=pltpu.CompilerParams(
            # Row tiles are independent -> shard across TensorCores (v7x megacore).
            dimension_semantics=("parallel",),
            # Lift the 16/32 MiB scoped VMEM default so big row tiles + resident
            # weights compile on all generations (usage here is far below this).
            vmem_limit_bytes=vmem_limit_bytes,
        ),
        cost_estimate=cost,
    )(x2, w1c, b1_2, w2c, b2_2)

    return out[:M].reshape(B, T, C)


def init_params(key, n_embd):
    """Deterministic init matching nn.Linear's U(-1/sqrt(fan_in), 1/sqrt(fan_in))."""
    hidden = 4 * n_embd
    k1, k2, k3, k4 = jax.random.split(key, 4)
    lim1 = 1.0 / jnp.sqrt(n_embd)
    lim2 = 1.0 / jnp.sqrt(hidden)
    w1 = jax.random.uniform(k1, (n_embd, hidden), jnp.float32, -lim1, lim1)
    b1 = jax.random.uniform(k2, (hidden,), jnp.float32, -lim1, lim1)
    w2 = jax.random.uniform(k3, (hidden, n_embd), jnp.float32, -lim2, lim2)
    b2 = jax.random.uniform(k4, (n_embd,), jnp.float32, -lim2, lim2)
    return w1, b1, w2, b2


def _reference(x, w1, b1, w2, b2):
    """Pure-JAX reference with the same bf16-input / f32-accum numerics."""
    B, T, C = x.shape
    xb = x.reshape(-1, C).astype(jnp.bfloat16)
    h = jnp.dot(xb, w1.astype(jnp.bfloat16),
                preferred_element_type=jnp.float32) + b1
    h = jnp.maximum(h, 0.0)
    o = jnp.dot(h.astype(jnp.bfloat16), w2.astype(jnp.bfloat16),
                preferred_element_type=jnp.float32) + b2
    return o.astype(x.dtype).reshape(B, T, C)


if __name__ == "__main__":
    n_embd = 128                       # small shape consistent with the module
    key = jax.random.PRNGKey(0)
    kx1, kx2, kp = jax.random.split(key, 3)
    w1, b1, w2, b2 = init_params(kp, n_embd)

    # Case 1: tiny (B, T) -> single grid step with a shrunken row tile.
    x1 = jax.random.normal(kx1, (2, 8, n_embd), jnp.float32)
    out1 = jax.block_until_ready(feedforward(x1, w1, b1, w2, b2))
    ref1 = _reference(x1, w1, b1, w2, b2)
    assert out1.shape == x1.shape
    assert jnp.allclose(out1, ref1, atol=1e-2, rtol=1e-2)

    # Case 2: more rows -> multi-step parallel grid + row-padding path (tm=256).
    x2 = jax.random.normal(kx2, (2, 192, n_embd), jnp.float32)
    out2 = jax.block_until_ready(feedforward(x2, w1, b1, w2, b2, tm=256))
    ref2 = _reference(x2, w1, b1, w2, b2)
    assert out2.shape == x2.shape
    assert jnp.allclose(out2, ref2, atol=1e-2, rtol=1e-2)

    print("KERNEL_OK")
</pallas_src>

<mosaic_0001>
module attributes {stable_mosaic.version = 11 : i64} {
  func.func @ffn_kernel(%arg0: i32, %arg1: memref<16x128xbf16, #tpu.memory_space<vmem>>, %arg2: memref<128x512xbf16, #tpu.memory_space<vmem>>, %arg3: memref<1x512xf32, #tpu.memory_space<vmem>>, %arg4: memref<512x128xbf16, #tpu.memory_space<vmem>>, %arg5: memref<1x128xf32, #tpu.memory_space<vmem>>, %arg6: memref<16x128xf32, #tpu.memory_space<vmem>>) attributes {dimension_semantics = [#tpu.dimension_semantics<parallel>], iteration_bounds = array<i64: 1>, scalar_prefetch = 0 : i64, scratch_operands = 0 : i64, tpu.core_type = #tpu.core_type<tc>, window_params = [{transform_indices = @transform_0, window_bounds = array<i64: 16, 128>}, {pipeline_mode = #tpu.pipeline_mode<synchronous>, transform_indices = @transform_1, window_bounds = array<i64: 128, 512>}, {pipeline_mode = #tpu.pipeline_mode<synchronous>, transform_indices = @transform_2, window_bounds = array<i64: 1, 512>}, {pipeline_mode = #tpu.pipeline_mode<synchronous>, transform_indices = @transform_3, window_bounds = array<i64: 512, 128>}, {pipeline_mode = #tpu.pipeline_mode<synchronous>, transform_indices = @transform_4, window_bounds = array<i64: 1, 128>}, {transform_indices = @transform_5, window_bounds = array<i64: 16, 128>}]} {
    %c0 = arith.constant 0 : index
    %c0_0 = arith.constant 0 : index
    %0 = vector.load %arg1[%c0, %c0_0] : memref<16x128xbf16, #tpu.memory_space<vmem>>, vector<16x128xbf16>
    %c0_1 = arith.constant 0 : index
    %c0_2 = arith.constant 0 : index
    %1 = vector.load %arg2[%c0_1, %c0_2] : memref<128x512xbf16, #tpu.memory_space<vmem>>, vector<128x512xbf16>
    %cst = arith.constant dense<0.000000e+00> : vector<16x512xf32>
    %2 = tpu.matmul %0, %1, %cst {dimension_numbers = #tpu.dot_dimension_numbers<[1], [0], [0], [1], [0, 0, 1, 1], [], []>} : vector<16x128xbf16>, vector<128x512xbf16>, vector<16x512xf32> -> vector<16x512xf32>
    %c0_3 = arith.constant 0 : index
    %c0_4 = arith.constant 0 : index
    %3 = vector.load %arg3[%c0_3, %c0_4] : memref<1x512xf32, #tpu.memory_space<vmem>>, vector<1x512xf32>
    %4 = vector.broadcast %3 : vector<1x512xf32> to vector<16x512xf32>
    %5 = arith.addf %2, %4 : vector<16x512xf32>
    %cst_5 = arith.constant 0.000000e+00 : f32
    %6 = vector.broadcast %cst_5 : f32 to vector<16x512xf32>
    %7 = arith.maximumf %5, %6 : vector<16x512xf32>
    %8 = arith.truncf %7 : vector<16x512xf32> to vector<16x512xbf16>
    %c0_6 = arith.constant 0 : index
    %c0_7 = arith.constant 0 : index
    %9 = vector.load %arg4[%c0_6, %c0_7] : memref<512x128xbf16, #tpu.memory_space<vmem>>, vector<512x128xbf16>
    %cst_8 = arith.constant dense<0.000000e+00> : vector<16x128xf32>
    %10 = tpu.matmul %8, %9, %cst_8 {dimension_numbers = #tpu.dot_dimension_numbers<[1], [0], [0], [1], [0, 0, 1, 1], [], []>} : vector<16x512xbf16>, vector<512x128xbf16>, vector<16x128xf32> -> vector<16x128xf32>
    %c0_9 = arith.constant 0 : index
    %c0_10 = arith.constant 0 : index
    %11 = vector.load %arg5[%c0_9, %c0_10] : memref<1x128xf32, #tpu.memory_space<vmem>>, vector<1x128xf32>
    %12 = vector.broadcast %11 : vector<1x128xf32> to vector<16x128xf32>
    %13 = arith.addf %10, %12 : vector<16x128xf32>
    %c0_11 = arith.constant 0 : index
    %c0_12 = arith.constant 0 : index
    %14 = vector.load %arg6[%c0_11, %c0_12] : memref<16x128xf32, #tpu.memory_space<vmem>>, vector<16x128xf32>
    tpu.vector_store %arg6[%c0_11, %c0_12], %13 {strides = array<i32>} : memref<16x128xf32, #tpu.memory_space<vmem>>, vector<16x128xf32>,
    return
  }
  func.func @transform_0(%arg0: i32) -> (i32, i32) {
    %c0_i32 = arith.constant 0 : i32
    %c0_i32_0 = arith.constant 0 : i32
    return %arg0, %c0_i32 : i32, i32
  }
  func.func @transform_1(%arg0: i32) -> (i32, i32) {
    %c0_i32 = arith.constant 0 : i32
    %c0_i32_0 = arith.constant 0 : i32
    %c0_i32_1 = arith.constant 0 : i32
    return %c0_i32, %c0_i32_0 : i32, i32
  }
  func.func @transform_2(%arg0: i32) -> (i32, i32) {
    %c0_i32 = arith.constant 0 : i32
    %c0_i32_0 = arith.constant 0 : i32
    %c0_i32_1 = arith.constant 0 : i32
    return %c0_i32, %c0_i32_0 : i32, i32
  }
  func.func @transform_3(%arg0: i32) -> (i32, i32) {
    %c0_i32 = arith.constant 0 : i32
    %c0_i32_0 = arith.constant 0 : i32
    %c0_i32_1 = arith.constant 0 : i32
    return %c0_i32, %c0_i32_0 : i32, i32
  }
  func.func @transform_4(%arg0: i32) -> (i32, i32) {
    %c0_i32 = arith.constant 0 : i32
    %c0_i32_0 = arith.constant 0 : i32
    %c0_i32_1 = arith.constant 0 : i32
    return %c0_i32, %c0_i32_0 : i32, i32
  }
  func.func @transform_5(%arg0: i32) -> (i32, i32) {
    %c0_i32 = arith.constant 0 : i32
    %c0_i32_0 = arith.constant 0 : i32
    return %arg0, %c0_i32 : i32, i32
  }
}

</mosaic_0001>

<llo_original>
// kernel: tpu_custom_call.1
$region0: #{tpu_custom_call.1}
  #allocation0 [shape = 'u32[]', space=smem, size = 0x4, offset = 0x4, fixed_abs, tag = 'smem constant byte address 0x4 - core index']
  #allocation1 [shape = 'u32[144,128]{1,0:T(1,128)}', space=vmem, size = 0x12000, scoped, tag = 'internal scratch']
  %s0 = inlined_call_operand.hbm [shape: bf16[16,128], index: 0, kind: input, shape index: {}]
  %s1 = inlined_call_operand.hbm [shape: bf16[128,512], index: 1, kind: input, shape index: {}]
  %s2 = inlined_call_operand.hbm [shape: f32[1,512], index: 2, kind: input, shape index: {}]
  %s3 = inlined_call_operand.hbm [shape: bf16[512,128], index: 3, kind: input, shape index: {}]
  %s4 = inlined_call_operand.vmem [shape: f32[1,128], index: 4, kind: input, shape index: {}]
  %s5 = inlined_call_operand.hbm [shape: f32[16,128], index: 5, kind: output, shape index: {}]
  %s6 = sld [smem:[#allocation0]]
  $region46: #{tpu_custom_call.1} parent=0
    _
  %s8 = ssub.s32 1, %s6
  %s9 = scalar_select 0, %s8, %s6
  $region1: #{tpu_custom_call.1} parent=0
    #allocation2 [shape = 'u8[4096]{0}', space=vmem, size = 0x1000, scoped, tag = 'input window, operand 0, single buffered']
    #allocation3 [shape = 's32[1]{0}', space=sflag, size = 0x4, scoped, tag = 'scoped memory for tpu_custom_call.1']
    #allocation4 [shape = 's32[1]{0}', space=sflag, size = 0x4, scoped, tag = 'scoped memory for tpu_custom_call.1']
    #allocation5 [shape = 'u8[131072]{0}', space=vmem, size = 0x20000, scoped, tag = 'input window, operand 1, single buffered']
    #allocation6 [shape = 's32[1]{0}', space=sflag, size = 0x4, scoped, tag = 'scoped memory for tpu_custom_call.1']
    #allocation7 [shape = 'u8[2048]{0}', space=vmem, size = 0x800, scoped, tag = 'input window, operand 2, single buffered']
    #allocation8 [shape = 'u8[131072]{0}', space=vmem, size = 0x20000, scoped, tag = 'input window, operand 3, single buffered']
    #allocation9 [shape = 's32[1]{0}', space=sflag, size = 0x4, scoped, tag = 'scoped memory for tpu_custom_call.1']
    #allocation10 [shape = 'u8[8192]{0}', space=vmem, size = 0x2000, scoped, tag = 'output window, operand 0, single buffered']
    %10 = vsyncpa [#allocation3], 0
    %11 = vsyncpa [#allocation6], 0
    %12 = vsyncpa [#allocation9], 0
    %13 = vsyncpa [#allocation4], 0
    // Predicated region
    $region2: #{tpu_custom_call.1} parent=1 // pred_check
      _
    $region3: #{tpu_custom_call.1} parent=1 // pred_check_branch
      %15 = sbr.rel (0) target = $region5
    $region4: #{tpu_custom_call.1} parent=1 // pred_region
      %s17 = ssub.s32 128, 128
      %18 = vsyncadd [#allocation3], %s17
      %s19 = sshll.u32 [#allocation2], 4
      %s20 = int_to_ptr.vmem [resolvable:$true] %s19
      %25 = dma.hbm_to_vmem [thread:$0]  %s0, 128, %s20, [#allocation3], 64, 64, 4
    $region5: #{tpu_custom_call.1} parent=1 // pred_fallthru
      _
    // Predicated region
    $region6: #{tpu_custom_call.1} parent=1 // pred_check
      _
    $region7: #{tpu_custom_call.1} parent=1 // pred_check_branch
      %27 = sbr.rel (0) target = $region9
    $region8: #{tpu_custom_call.1} parent=1 // pred_region
      %s29 = ssub.s32 4096, 4096
      %30 = vsyncadd [#allocation6], %s29
      %s31 = sshll.u32 [#allocation5], 4
      %s32 = int_to_ptr.vmem [resolvable:$true] %s31
      %37 = dma.hbm_to_vmem [thread:$0]  %s1, 4096, %s32, [#allocation6], 256, 256, 16
    $region9: #{tpu_custom_call.1} parent=1 // pred_fallthru
      _
    // Predicated region
    $region10: #{tpu_custom_call.1} parent=1 // pred_check
      _
    $region11: #{tpu_custom_call.1} parent=1 // pred_check_branch
      %39 = sbr.rel (0) target = $region13
    $region12: #{tpu_custom_call.1} parent=1 // pred_region
      %s41 = ssub.s32 64, 64
      %42 = vsyncadd [#allocation6], %s41
      %s44 = sshll.u32 [#allocation7], 4
      %s45 = int_to_ptr.vmem [resolvable:$true] %s44
      %47 = dma.hbm_to_vmem [thread:$0]  %s2, 64, %s45, [#allocation6]
    $region13: #{tpu_custom_call.1} parent=1 // pred_fallthru
      _
    // Predicated region
    $region14: #{tpu_custom_call.1} parent=1 // pred_check
      _
    $region15: #{tpu_custom_call.1} parent=1 // pred_check_branch
      %49 = sbr.rel (0) target = $region17
    $region16: #{tpu_custom_call.1} parent=1 // pred_region
      %s51 = ssub.s32 4096, 4096
      %52 = vsyncadd [#allocation9], %s51
      %s53 = sshll.u32 [#allocation8], 4
      %s54 = int_to_ptr.vmem [resolvable:$true] %s53
      %59 = dma.hbm_to_vmem [thread:$0]  %s3, 4096, %s54, [#allocation9], 64, 64, 4
    $region17: #{tpu_custom_call.1} parent=1 // pred_fallthru
      _
    // Predicated region
    $region18: #{tpu_custom_call.1} parent=1 // pred_check
      _
    $region19: #{tpu_custom_call.1} parent=1 // pred_check_branch
      %61 = sbr.rel (0) target = $region21
    $region20: #{tpu_custom_call.1} parent=1 // pred_region
      _
    $region21: #{tpu_custom_call.1} parent=1 // pred_fallthru
      _
    // Predicated region
    $region22: #{tpu_custom_call.1} parent=1 // pred_check
      _
    $region23: #{tpu_custom_call.1} parent=1 // pred_check_branch
      %63 = sbr.rel (0) target = $region25
    $region24: #{tpu_custom_call.1} parent=1 // pred_region
      %64 = dma.done [#allocation3], 128
    $region25: #{tpu_custom_call.1} parent=1 // pred_fallthru
      _
    // Predicated region
    $region26: #{tpu_custom_call.1} parent=1 // pred_check
      _
    $region27: #{tpu_custom_call.1} parent=1 // pred_check_branch
      %66 = sbr.rel (0) target = $region29
    $region28: #{tpu_custom_call.1} parent=1 // pred_region
      %67 = dma.done [#allocation6], 4096
    $region29: #{tpu_custom_call.1} parent=1 // pred_fallthru
      _
    // Predicated region
    $region30: #{tpu_custom_call.1} parent=1 // pred_check
      _
    $region31: #{tpu_custom_call.1} parent=1 // pred_check_branch
      %69 = sbr.rel (0) target = $region33
    $region32: #{tpu_custom_call.1} parent=1 // pred_region
      %70 = dma.done [#allocation6], 64
    $region33: #{tpu_custom_call.1} parent=1 // pred_fallthru
      _
    // Predicated region
    $region34: #{tpu_custom_call.1} parent=1 // pred_check
      _
    $region35: #{tpu_custom_call.1} parent=1 // pred_check_branch
      %72 = sbr.rel (0) target = $region37
    $region36: #{tpu_custom_call.1} parent=1 // pred_region
      %73 = dma.done [#allocation9], 4096
    $region37: #{tpu_custom_call.1} parent=1 // pred_fallthru
      _
    %v75 = vld [vmem:[#allocation2] sm:$0xf]
    %v76 = vld [vmem:[#allocation2 + $0x4] sm:$0xf]
    %v77 = vld [vmem:[#allocation5] sm:$0xff]
    %v78 = vld [vmem:[#allocation5 + $0x8] sm:$0xff]
    %v79 = vld [vmem:[#allocation5 + $0x10] sm:$0xff]
    %v80 = vld [vmem:[#allocation5 + $0x18] sm:$0xff]
    %v81 = vld [vmem:[#allocation5 + $0x20] sm:$0xff]
    %v82 = vld [vmem:[#allocation5 + $0x28] sm:$0xff]
    %v83 = vld [vmem:[#allocation5 + $0x30] sm:$0xff]
    %v84 = vld [vmem:[#allocation5 + $0x38] sm:$0xff]
    %v85 = vld [vmem:[#allocation5 + $0x40] sm:$0xff]
    %v86 = vld [vmem:[#allocation5 + $0x48] sm:$0xff]
    %v87 = vld [vmem:[#allocation5 + $0x50] sm:$0xff]
    %v88 = vld [vmem:[#allocation5 + $0x58] sm:$0xff]
    %v89 = vld [vmem:[#allocation5 + $0x60] sm:$0xff]
    %v90 = vld [vmem:[#allocation5 + $0x68] sm:$0xff]
    %v91 = vld [vmem:[#allocation5 + $0x70] sm:$0xff]
    %v92 = vld [vmem:[#allocation5 + $0x78] sm:$0xff]
    %v93 = vld [vmem:[#allocation5 + $0x80] sm:$0xff]
    %v94 = vld [vmem:[#allocation5 + $0x88] sm:$0xff]
    %v95 = vld [vmem:[#allocation5 + $0x90] sm:$0xff]
    %v96 = vld [vmem:[#allocation5 + $0x98] sm:$0xff]
    %v97 = vld [vmem:[#allocation5 + $0xa0] sm:$0xff]
    %v98 = vld [vmem:[#allocation5 + $0xa8] sm:$0xff]
    %v99 = vld [vmem:[#allocation5 + $0xb0] sm:$0xff]
    %v100 = vld [vmem:[#allocation5 + $0xb8] sm:$0xff]
    %v101 = vld [vmem:[#allocation5 + $0xc0] sm:$0xff]
    %v102 = vld [vmem:[#allocation5 + $0xc8] sm:$0xff]
    %v103 = vld [vmem:[#allocation5 + $0xd0] sm:$0xff]
    %v104 = vld [vmem:[#allocation5 + $0xd8] sm:$0xff]
    %v105 = vld [vmem:[#allocation5 + $0xe0] sm:$0xff]
    %v106 = vld [vmem:[#allocation5 + $0xe8] sm:$0xff]
    %v107 = vld [vmem:[#allocation5 + $0xf0] sm:$0xff]
    %v108 = vld [vmem:[#allocation5 + $0xf8] sm:$0xff]
    %v109 = vld [vmem:[#allocation7] sm:$0xf]
    %v111 = vlaneseq
    %v112 = vshrl.u32 %v111, 7
    %v113 = vsub.s32 0, %v112
    %v114 = vrot.slane %v109, %v113
    %v115 = vlaneseq
    %v116 = vshrl.u32 %v115, 7
    %v117 = vsub.s32 1, %v116
    %v118 = vrot.slane %v109, %v117
    %v119 = vlaneseq
    %v120 = vshrl.u32 %v119, 7
    %v121 = vsub.s32 2, %v120
    %v122 = vrot.slane %v109, %v121
    %v123 = vlaneseq
    %v124 = vshrl.u32 %v123, 7
    %v125 = vsub.s32 3, %v124
    %v126 = vrot.slane %v109, %v125
    %v133 = vunpack.c.l.b16 %v75
    %v134 = vunpack.c.l.b16 %v76
    %v135 = vpack.c.b16 %v134, %v133
    %v169 = vunpack.c.l.b16 %v77
    %v170 = vunpack.c.h.b16 %v77
    %v171 = vunpack.c.l.b16 %v78
    %v172 = vunpack.c.h.b16 %v78
    %v173 = vunpack.c.l.b16 %v79
    %v174 = vunpack.c.h.b16 %v79
    %v175 = vunpack.c.l.b16 %v80
    %v176 = vunpack.c.h.b16 %v80
    %v177 = vunpack.c.l.b16 %v81
    %v178 = vunpack.c.h.b16 %v81
    %v179 = vunpack.c.l.b16 %v82
    %v180 = vunpack.c.h.b16 %v82
    %v181 = vunpack.c.l.b16 %v83
    %v182 = vunpack.c.h.b16 %v83
    %v183 = vunpack.c.l.b16 %v84
    %v184 = vunpack.c.h.b16 %v84
    %v185 = vunpack.c.l.b16 %v85
    %v186 = vunpack.c.h.b16 %v85
    %v187 = vunpack.c.l.b16 %v86
    %v188 = vunpack.c.h.b16 %v86
    %v189 = vunpack.c.l.b16 %v87
    %v190 = vunpack.c.h.b16 %v87
    %v191 = vunpack.c.l.b16 %v88
    %v192 = vunpack.c.h.b16 %v88
    %v193 = vunpack.c.l.b16 %v89
    %v194 = vunpack.c.h.b16 %v89
    %v195 = vunpack.c.l.b16 %v90
    %v196 = vunpack.c.h.b16 %v90
    %v197 = vunpack.c.l.b16 %v91
    %v198 = vunpack.c.h.b16 %v91
    %v199 = vunpack.c.l.b16 %v92
    %v200 = vunpack.c.h.b16 %v92
    %v201 = vunpack.c.l.b16 %v93
    %v202 = vunpack.c.h.b16 %v93
    %v203 = vunpack.c.l.b16 %v94
    %v204 = vunpack.c.h.b16 %v94
    %v205 = vunpack.c.l.b16 %v95
    %v206 = vunpack.c.h.b16 %v95
    %v207 = vunpack.c.l.b16 %v96
    %v208 = vunpack.c.h.b16 %v96
    %v209 = vunpack.c.l.b16 %v97
    %v210 = vunpack.c.h.b16 %v97
    %v211 = vunpack.c.l.b16 %v98
    %v212 = vunpack.c.h.b16 %v98
    %v213 = vunpack.c.l.b16 %v99
    %v214 = vunpack.c.h.b16 %v99
    %v215 = vunpack.c.l.b16 %v100
    %v216 = vunpack.c.h.b16 %v100
    %v217 = vunpack.c.l.b16 %v101
    %v218 = vunpack.c.h.b16 %v101
    %v219 = vunpack.c.l.b16 %v102
    %v220 = vunpack.c.h.b16 %v102
    %v221 = vunpack.c.l.b16 %v103
    %v222 = vunpack.c.h.b16 %v103
    %v223 = vunpack.c.l.b16 %v104
    %v224 = vunpack.c.h.b16 %v104
    %v225 = vunpack.c.l.b16 %v105
    %v226 = vunpack.c.h.b16 %v105
    %v227 = vunpack.c.l.b16 %v106
    %v228 = vunpack.c.h.b16 %v106
    %v229 = vunpack.c.l.b16 %v107
    %v230 = vunpack.c.h.b16 %v107
    %v231 = vunpack.c.l.b16 %v108
    %v232 = vunpack.c.h.b16 %v108
    %v233 = vpack.c.b16 %v173, %v169
    %v234 = vpack.c.b16 %v174, %v170
    %v235 = vpack.c.b16 %v175, %v171
    %v236 = vpack.c.b16 %v176, %v172
    %v237 = vpack.c.b16 %v181, %v177
    %v238 = vpack.c.b16 %v182, %v178
    %v239 = vpack.c.b16 %v183, %v179
    %v240 = vpack.c.b16 %v184, %v180
    %v241 = vpack.c.b16 %v189, %v185
    %v242 = vpack.c.b16 %v190, %v186
    %v243 = vpack.c.b16 %v191, %v187
    %v244 = vpack.c.b16 %v192, %v188
    %v245 = vpack.c.b16 %v197, %v193
    %v246 = vpack.c.b16 %v198, %v194
    %v247 = vpack.c.b16 %v199, %v195
    %v248 = vpack.c.b16 %v200, %v196
    %v249 = vpack.c.b16 %v205, %v201
    %v250 = vpack.c.b16 %v206, %v202
    %v251 = vpack.c.b16 %v207, %v203
    %v252 = vpack.c.b16 %v208, %v204
    %v253 = vpack.c.b16 %v213, %v209
    %v254 = vpack.c.b16 %v214, %v210
    %v255 = vpack.c.b16 %v215, %v211
    %v256 = vpack.c.b16 %v216, %v212
    %v257 = vpack.c.b16 %v221, %v217
    %v258 = vpack.c.b16 %v222, %v218
    %v259 = vpack.c.b16 %v223, %v219
    %v260 = vpack.c.b16 %v224, %v220
    %v261 = vpack.c.b16 %v229, %v225
    %v262 = vpack.c.b16 %v230, %v226
    %v263 = vpack.c.b16 %v231, %v227
    %v264 = vpack.c.b16 %v232, %v228
    %297 = vmatprep.subr.bf16.mxu0 %v262
    %298 = vmatpush1.bf16.msra.mxu0 %v261
    %299 = vmatprep.subr.bf16.mxu0 %v258
    %300 = vmatpush1.bf16.msra.mxu0 %v257
    %301 = vmatprep.subr.bf16.mxu0 %v254
    %302 = vmatpush1.bf16.msra.mxu0 %v253
    %303 = vmatprep.subr.bf16.mxu0 %v250
    %304 = vmatpush1.bf16.msra.mxu0 %v249
    %305 = vmatprep.subr.bf16.mxu0 %v246
    %306 = vmatpush1.bf16.msra.mxu0 %v245
    %307 = vmatprep.subr.bf16.mxu0 %v242
    %308 = vmatpush1.bf16.msra.mxu0 %v241
    %309 = vmatprep.subr.bf16.mxu0 %v238
    %310 = vmatpush1.bf16.msra.mxu0 %v237
    %311 = vmatprep.subr.bf16.mxu0 %v234
    %312 = vmatpush1.bf16.msra.mxu0 %v233
    %313 = vmatprep.subr.bf16.mxu0 0
    %314 = vmatpush2.bf16.msra.mxu0 0
    %315 = vmatprep.subr.bf16.mxu0 0
    %316 = vmatpush2.bf16.msra.mxu0 0
    %317 = vmatprep.subr.bf16.mxu0 0
    %318 = vmatpush2.bf16.msra.mxu0 0
    %319 = vmatprep.subr.bf16.mxu0 0
    %320 = vmatpush2.bf16.msra.mxu0 0
    %321 = vmatprep.subr.bf16.mxu0 0
    %322 = vmatpush2.bf16.msra.mxu0 0
    %323 = vmatprep.subr.bf16.mxu0 0
    %324 = vmatpush2.bf16.msra.mxu0 0
    %325 = vmatprep.subr.bf16.mxu0 0
    %326 = vmatpush2.bf16.msra.mxu0 0
    %327 = vmatprep.subr.bf16.mxu0 0
    %328 = vmatpush2.bf16.msra.mxu0 0
    %329 = vmatprep.mubr.bf16.mxu0 0
    %330 = vmatmul.mubr.bf16.gmra.mxu0 %v135
    %v331 = vpop.f32.mrf.mxu0
    %v332 = vadd.f32 %v114, %v331
    %v333 = vpop.f32.mrf.mxu0
    %v334 = vadd.f32 %v118, %v333
    %v335 = vpop.f32.mrf.mxu0
    %v336 = vadd.f32 %v114, %v335
    %v337 = vpop.f32.mrf.mxu0
    %v338 = vadd.f32 %v118, %v337
    %339 = vdwg.mxu0
    %340 = vmatprep.subr.bf16.mxu0 %v264
    %341 = vmatpush1.bf16.msra.mxu0 %v263
    %342 = vmatprep.subr.bf16.mxu0 %v260
    %343 = vmatpush1.bf16.msra.mxu0 %v259
    %344 = vmatprep.subr.bf16.mxu0 %v256
    %345 = vmatpush1.bf16.msra.mxu0 %v255
    %346 = vmatprep.subr.bf16.mxu0 %v252
    %347 = vmatpush1.bf16.msra.mxu0 %v251
    %348 = vmatprep.subr.bf16.mxu0 %v248
    %349 = vmatpush1.bf16.msra.mxu0 %v247
    %350 = vmatprep.subr.bf16.mxu0 %v244
    %351 = vmatpush1.bf16.msra.mxu0 %v243
    %352 = vmatprep.subr.bf16.mxu0 %v240
    %353 = vmatpush1.bf16.msra.mxu0 %v239
    %354 = vmatprep.subr.bf16.mxu0 %v236
    %355 = vmatpush1.bf16.msra.mxu0 %v235
    %356 = vmatprep.subr.bf16.mxu0 0
    %357 = vmatpush2.bf16.msra.mxu0 0
    %358 = vmatprep.subr.bf16.mxu0 0
    %359 = vmatpush2.bf16.msra.mxu0 0
    %360 = vmatprep.subr.bf16.mxu0 0
    %361 = vmatpush2.bf16.msra.mxu0 0
    %362 = vmatprep.subr.bf16.mxu0 0
    %363 = vmatpush2.bf16.msra.mxu0 0
    %364 = vmatprep.subr.bf16.mxu0 0
    %365 = vmatpush2.bf16.msra.mxu0 0
    %366 = vmatprep.subr.bf16.mxu0 0
    %367 = vmatpush2.bf16.msra.mxu0 0
    %368 = vmatprep.subr.bf16.mxu0 0
    %369 = vmatpush2.bf16.msra.mxu0 0
    %370 = vmatprep.subr.bf16.mxu0 0
    %371 = vmatpush2.bf16.msra.mxu0 0
    %372 = vmatprep.mubr.bf16.mxu0 0
    %373 = vmatmul.mubr.bf16.gmra.mxu0 %v135
    %v374 = vpop.f32.mrf.mxu0
    %v375 = vadd.f32 %v122, %v374
    %v376 = vpop.f32.mrf.mxu0
    %v377 = vadd.f32 %v126, %v376
    %v378 = vpop.f32.mrf.mxu0
    %v379 = vadd.f32 %v122, %v378
    %v380 = vpop.f32.mrf.mxu0
    %v381 = vadd.f32 %v126, %v380
    %382 = vdwg.mxu0
    %v383 = vmax.f32 %v332, 0.0
    %v384 = vmax.f32 %v334, 0.0
    %v385 = vmax.f32 %v375, 0.0
    %v386 = vmax.f32 %v377, 0.0
    %v387 = vmax.f32 %v336, 0.0
    %v388 = vmax.f32 %v338, 0.0
    %v389 = vmax.f32 %v379, 0.0
    %v390 = vmax.f32 %v381, 0.0
    %v391 = vpack.c.bf16 %v387, %v383
    %v392 = vpack.c.bf16 %v388, %v384
    %v393 = vpack.c.bf16 %v389, %v385
    %v394 = vpack.c.bf16 %v390, %v386
    %v395 = vld [vmem:[#allocation8] sm:$0xf]
    %v396 = vld [vmem:[#allocation8 + $0x4] sm:$0xf]
    %v397 = vld [vmem:[#allocation8 + $0x8] sm:$0xf]
    %v398 = vld [vmem:[#allocation8 + $0xc] sm:$0xf]
    %v399 = vld [vmem:[#allocation8 + $0x10] sm:$0xf]
    %v400 = vld [vmem:[#allocation8 + $0x14] sm:$0xf]
    %v401 = vld [vmem:[#allocation8 + $0x18] sm:$0xf]
    %v402 = vld [vmem:[#allocation8 + $0x1c] sm:$0xf]
    %v403 = vld [vmem:[#allocation8 + $0x20] sm:$0xf]
    %v404 = vld [vmem:[#allocation8 + $0x24] sm:$0xf]
    %v405 = vld [vmem:[#allocation8 + $0x28] sm:$0xf]
    %v406 = vld [vmem:[#allocation8 + $0x2c] sm:$0xf]
    %v407 = vld [vmem:[#allocation8 + $0x30] sm:$0xf]
    %v408 = vld [vmem:[#allocation8 + $0x34] sm:$0xf]
    %v409 = vld [vmem:[#allocation8 + $0x38] sm:$0xf]
    %v410 = vld [vmem:[#allocation8 + $0x3c] sm:$0xf]
    %v411 = vld [vmem:[#allocation8 + $0x40] sm:$0xf]
    %v412 = vld [vmem:[#allocation8 + $0x44] sm:$0xf]
    %v413 = vld [vmem:[#allocation8 + $0x48] sm:$0xf]
    %v414 = vld [vmem:[#allocation8 + $0x4c] sm:$0xf]
    %v415 = vld [vmem:[#allocation8 + $0x50] sm:$0xf]
    %v416 = vld [vmem:[#allocation8 + $0x54] sm:$0xf]
    %v417 = vld [vmem:[#allocation8 + $0x58] sm:$0xf]
    %v418 = vld [vmem:[#allocation8 + $0x5c] sm:$0xf]
    %v419 = vld [vmem:[#allocation8 + $0x60] sm:$0xf]
    %v420 = vld [vmem:[#allocation8 + $0x64] sm:$0xf]
    %v421 = vld [vmem:[#allocation8 + $0x68] sm:$0xf]
    %v422 = vld [vmem:[#allocation8 + $0x6c] sm:$0xf]
    %v423 = vld [vmem:[#allocation8 + $0x70] sm:$0xf]
    %v424 = vld [vmem:[#allocation8 + $0x74] sm:$0xf]
    %v425 = vld [vmem:[#allocation8 + $0x78] sm:$0xf]
    %v426 = vld [vmem:[#allocation8 + $0x7c] sm:$0xf]
    %v427 = vld [vmem:[#allocation8 + $0x80] sm:$0xf]
    %v428 = vld [vmem:[#allocation8 + $0x84] sm:$0xf]
    %v429 = vld [vmem:[#allocation8 + $0x88] sm:$0xf]
    %v430 = vld [vmem:[#allocation8 + $0x8c] sm:$0xf]
    %v431 = vld [vmem:[#allocation8 + $0x90] sm:$0xf]
    %v432 = vld [vmem:[#allocation8 + $0x94] sm:$0xf]
    %v433 = vld [vmem:[#allocation8 + $0x98] sm:$0xf]
    %v434 = vld [vmem:[#allocation8 + $0x9c] sm:$0xf]
    %v435 = vld [vmem:[#allocation8 + $0xa0] sm:$0xf]
    %v436 = vld [vmem:[#allocation8 + $0xa4] sm:$0xf]
    %v437 = vld [vmem:[#allocation8 + $0xa8] sm:$0xf]
    %v438 = vld [vmem:[#allocation8 + $0xac] sm:$0xf]
    %v439 = vld [vmem:[#allocation8 + $0xb0] sm:$0xf]
    %v440 = vld [vmem:[#allocation8 + $0xb4] sm:$0xf]
    %v441 = vld [vmem:[#allocation8 + $0xb8] sm:$0xf]
    %v442 = vld [vmem:[#allocation8 + $0xbc] sm:$0xf]
    %v443 = vld [vmem:[#allocation8 + $0xc0] sm:$0xf]
    %v444 = vld [vmem:[#allocation8 + $0xc4] sm:$0xf]
    %v445 = vld [vmem:[#allocation8 + $0xc8] sm:$0xf]
    %v446 = vld [vmem:[#allocation8 + $0xcc] sm:$0xf]
    %v447 = vld [vmem:[#allocation8 + $0xd0] sm:$0xf]
    %v448 = vld [vmem:[#allocation8 + $0xd4] sm:$0xf]
    %v449 = vld [vmem:[#allocation8 + $0xd8] sm:$0xf]
    %v450 = vld [vmem:[#allocation8 + $0xdc] sm:$0xf]
    %v451 = vld [vmem:[#allocation8 + $0xe0] sm:$0xf]
    %v452 = vld [vmem:[#allocation8 + $0xe4] sm:$0xf]
    %v453 = vld [vmem:[#allocation8 + $0xe8] sm:$0xf]
    %v454 = vld [vmem:[#allocation8 + $0xec] sm:$0xf]
    %v455 = vld [vmem:[#allocation8 + $0xf0] sm:$0xf]
    %v456 = vld [vmem:[#allocation8 + $0xf4] sm:$0xf]
    %v457 = vld [vmem:[#allocation8 + $0xf8] sm:$0xf]
    %v458 = vld [vmem:[#allocation8 + $0xfc] sm:$0xf]
    %v459 = vld [vmem:[%s4] sm:$0x1]
    %v461 = vlaneseq
    %v462 = vshrl.u32 %v461, 7
    %v463 = vsub.s32 0, %v462
    %v464 = vrot.slane %v459, %v463
    %v530 = vunpack.c.l.b16 %v395
    %v531 = vunpack.c.l.b16 %v396
    %v532 = vunpack.c.l.b16 %v397
    %v533 = vunpack.c.l.b16 %v398
    %v534 = vunpack.c.l.b16 %v399
    %v535 = vunpack.c.l.b16 %v400
    %v536 = vunpack.c.l.b16 %v401
    %v537 = vunpack.c.l.b16 %v402
    %v538 = vunpack.c.l.b16 %v403
    %v539 = vunpack.c.l.b16 %v404
    %v540 = vunpack.c.l.b16 %v405
    %v541 = vunpack.c.l.b16 %v406
    %v542 = vunpack.c.l.b16 %v407
    %v543 = vunpack.c.l.b16 %v408
    %v544 = vunpack.c.l.b16 %v409
    %v545 = vunpack.c.l.b16 %v410
    %v546 = vunpack.c.l.b16 %v411
    %v547 = vunpack.c.l.b16 %v412
    %v548 = vunpack.c.l.b16 %v413
    %v549 = vunpack.c.l.b16 %v414
    %v550 = vunpack.c.l.b16 %v415
    %v551 = vunpack.c.l.b16 %v416
    %v552 = vunpack.c.l.b16 %v417
    %v553 = vunpack.c.l.b16 %v418
    %v554 = vunpack.c.l.b16 %v419
    %v555 = vunpack.c.l.b16 %v420
    %v556 = vunpack.c.l.b16 %v421
    %v557 = vunpack.c.l.b16 %v422
    %v558 = vunpack.c.l.b16 %v423
    %v559 = vunpack.c.l.b16 %v424
    %v560 = vunpack.c.l.b16 %v425
    %v561 = vunpack.c.l.b16 %v426
    %v562 = vunpack.c.l.b16 %v427
    %v563 = vunpack.c.l.b16 %v428
    %v564 = vunpack.c.l.b16 %v429
    %v565 = vunpack.c.l.b16 %v430
    %v566 = vunpack.c.l.b16 %v431
    %v567 = vunpack.c.l.b16 %v432
    %v568 = vunpack.c.l.b16 %v433
    %v569 = vunpack.c.l.b16 %v434
    %v570 = vunpack.c.l.b16 %v435
    %v571 = vunpack.c.l.b16 %v436
    %v572 = vunpack.c.l.b16 %v437
    %v573 = vunpack.c.l.b16 %v438
    %v574 = vunpack.c.l.b16 %v439
    %v575 = vunpack.c.l.b16 %v440
    %v576 = vunpack.c.l.b16 %v441
    %v577 = vunpack.c.l.b16 %v442
    %v578 = vunpack.c.l.b16 %v443
    %v579 = vunpack.c.l.b16 %v444
    %v580 = vunpack.c.l.b16 %v445
    %v581 = vunpack.c.l.b16 %v446
    %v582 = vunpack.c.l.b16 %v447
    %v583 = vunpack.c.l.b16 %v448
    %v584 = vunpack.c.l.b16 %v449
    %v585 = vunpack.c.l.b16 %v450
    %v586 = vunpack.c.l.b16 %v451
    %v587 = vunpack.c.l.b16 %v452
    %v588 = vunpack.c.l.b16 %v453
    %v589 = vunpack.c.l.b16 %v454
    %v590 = vunpack.c.l.b16 %v455
    %v591 = vunpack.c.l.b16 %v456
    %v592 = vunpack.c.l.b16 %v457
    %v593 = vunpack.c.l.b16 %v458
    %v594 = vpack.c.b16 %v531, %v530
    %v595 = vpack.c.b16 %v533, %v532
    %v596 = vpack.c.b16 %v535, %v534
    %v597 = vpack.c.b16 %v537, %v536
    %v598 = vpack.c.b16 %v539, %v538
    %v599 = vpack.c.b16 %v541, %v540
    %v600 = vpack.c.b16 %v543, %v542
    %v601 = vpack.c.b16 %v545, %v544
    %v602 = vpack.c.b16 %v547, %v546
    %v603 = vpack.c.b16 %v549, %v548
    %v604 = vpack.c.b16 %v551, %v550
    %v605 = vpack.c.b16 %v553, %v552
    %v606 = vpack.c.b16 %v555, %v554
    %v607 = vpack.c.b16 %v557, %v556
    %v608 = vpack.c.b16 %v559, %v558
    %v609 = vpack.c.b16 %v561, %v560
    %v610 = vpack.c.b16 %v563, %v562
    %v611 = vpack.c.b16 %v565, %v564
    %v612 = vpack.c.b16 %v567, %v566
    %v613 = vpack.c.b16 %v569, %v568
    %v614 = vpack.c.b16 %v571, %v570
    %v615 = vpack.c.b16 %v573, %v572
    %v616 = vpack.c.b16 %v575, %v574
    %v617 = vpack.c.b16 %v577, %v576
    %v618 = vpack.c.b16 %v579, %v578
    %v619 = vpack.c.b16 %v581, %v580
    %v620 = vpack.c.b16 %v583, %v582
    %v621 = vpack.c.b16 %v585, %v584
    %v622 = vpack.c.b16 %v587, %v586
    %v623 = vpack.c.b16 %v589, %v588
    %v624 = vpack.c.b16 %v591, %v590
    %v625 = vpack.c.b16 %v593, %v592
    %658 = vmatprep.subr.bf16.mxu0 0
    %659 = vmatpush1.bf16.msra.mxu0 %v601
    %660 = vmatprep.subr.bf16.mxu0 0
    %661 = vmatpush1.bf16.msra.mxu0 %v600
    %662 = vmatprep.subr.bf16.mxu0 0
    %663 = vmatpush1.bf16.msra.mxu0 %v599
    %664 = vmatprep.subr.bf16.mxu0 0
    %665 = vmatpush1.bf16.msra.mxu0 %v598
    %666 = vmatprep.subr.bf16.mxu0 0
    %667 = vmatpush1.bf16.msra.mxu0 %v597
    %668 = vmatprep.subr.bf16.mxu0 0
    %669 = vmatpush1.bf16.msra.mxu0 %v596
    %670 = vmatprep.subr.bf16.mxu0 0
    %671 = vmatpush1.bf16.msra.mxu0 %v595
    %672 = vmatprep.subr.bf16.mxu0 0
    %673 = vmatpush1.bf16.msra.mxu0 %v594
    %674 = vmatprep.subr.bf16.mxu0 0
    %675 = vmatpush2.bf16.msra.mxu0 %v609
    %676 = vmatprep.subr.bf16.mxu0 0
    %677 = vmatpush2.bf16.msra.mxu0 %v608
    %678 = vmatprep.subr.bf16.mxu0 0
    %679 = vmatpush2.bf16.msra.mxu0 %v607
    %680 = vmatprep.subr.bf16.mxu0 0
    %681 = vmatpush2.bf16.msra.mxu0 %v606
    %682 = vmatprep.subr.bf16.mxu0 0
    %683 = vmatpush2.bf16.msra.mxu0 %v605
    %684 = vmatprep.subr.bf16.mxu0 0
    %685 = vmatpush2.bf16.msra.mxu0 %v604
    %686 = vmatprep.subr.bf16.mxu0 0
    %687 = vmatpush2.bf16.msra.mxu0 %v603
    %688 = vmatprep.subr.bf16.mxu0 0
    %689 = vmatpush2.bf16.msra.mxu0 %v602
    %690 = vmatprep.mubr.bf16.mxu0 %v392
    %691 = vmatmul.mubr.bf16.gmra.mxu0 %v391
    %v692 = vpop.f32.mrf.mxu0
    %v693 = vadd.f32 %v464, %v692
    %v694 = vpop.f32.mrf.mxu0
    %v695 = vpop.f32.mrf.mxu0
    %v696 = vadd.f32 %v464, %v695
    %v697 = vpop.f32.mrf.mxu0
    %698 = vdwg.mxu0
    %699 = vmatprep.subr.bf16.mxu0 0
    %700 = vmatpush1.bf16.msra.mxu0 %v617
    %701 = vmatprep.subr.bf16.mxu0 0
    %702 = vmatpush1.bf16.msra.mxu0 %v616
    %703 = vmatprep.subr.bf16.mxu0 0
    %704 = vmatpush1.bf16.msra.mxu0 %v615
    %705 = vmatprep.subr.bf16.mxu0 0
    %706 = vmatpush1.bf16.msra.mxu0 %v614
    %707 = vmatprep.subr.bf16.mxu0 0
    %708 = vmatpush1.bf16.msra.mxu0 %v613
    %709 = vmatprep.subr.bf16.mxu0 0
    %710 = vmatpush1.bf16.msra.mxu0 %v612
    %711 = vmatprep.subr.bf16.mxu0 0
    %712 = vmatpush1.bf16.msra.mxu0 %v611
    %713 = vmatprep.subr.bf16.mxu0 0
    %714 = vmatpush1.bf16.msra.mxu0 %v610
    %715 = vmatprep.subr.bf16.mxu0 0
    %716 = vmatpush2.bf16.msra.mxu0 %v625
    %717 = vmatprep.subr.bf16.mxu0 0
    %718 = vmatpush2.bf16.msra.mxu0 %v624
    %719 = vmatprep.subr.bf16.mxu0 0
    %720 = vmatpush2.bf16.msra.mxu0 %v623
    %721 = vmatprep.subr.bf16.mxu0 0
    %722 = vmatpush2.bf16.msra.mxu0 %v622
    %723 = vmatprep.subr.bf16.mxu0 0
    %724 = vmatpush2.bf16.msra.mxu0 %v621
    %725 = vmatprep.subr.bf16.mxu0 0
    %726 = vmatpush2.bf16.msra.mxu0 %v620
    %727 = vmatprep.subr.bf16.mxu0 0
    %728 = vmatpush2.bf16.msra.mxu0 %v619
    %729 = vmatprep.subr.bf16.mxu0 0
    %730 = vmatpush2.bf16.msra.mxu0 %v618
    %731 = vmatprep.mubr.bf16.mxu0 %v394
    %732 = vmatmul.mubr.bf16.gmra.mxu0 %v393
    %v733 = vpop.f32.mrf.mxu0
    %v734 = vadd.f32 %v693, %v733
    %v735 = vpop.f32.mrf.mxu0
    %v736 = vpop.f32.mrf.mxu0
    %v737 = vadd.f32 %v696, %v736
    %v738 = vpop.f32.mrf.mxu0
    %739 = vdwg.mxu0
    %740 = vst [vmem:[#allocation10] sm:$0xff] %v734
    %741 = vst [vmem:[#allocation10 + $0x8] sm:$0xff] %v737
    // Predicated region
    $region38: #{tpu_custom_call.1} parent=1 // pred_check
      _
    $region39: #{tpu_custom_call.1} parent=1 // pred_check_branch
      %743 = sbr.rel (0) target = $region41
    $region40: #{tpu_custom_call.1} parent=1 // pred_region
      %s745 = ssub.s32 256, 256
      %746 = vsyncadd [#allocation4], %s745
      %s747 = sshll.u32 [#allocation10], 4
      %s748 = int_to_ptr.vmem [resolvable:$true] %s747
      %753 = dma.vmem_to_hbm [thread:$0]  %s748, 256, %s5, [#allocation4], 128, 128, 8
    $region41: #{tpu_custom_call.1} parent=1 // pred_fallthru
      _
    // Predicated region
    $region42: #{tpu_custom_call.1} parent=1 // pred_check
      _
    $region43: #{tpu_custom_call.1} parent=1 // pred_check_branch
      %755 = sbr.rel (0) target = $region45
    $region44: #{tpu_custom_call.1} parent=1 // pred_region
      %756 = dma.done [#allocation4], 256
    $region45: #{tpu_custom_call.1} parent=1 // pred_fallthru
      _
    %757 = vsyncpa [#allocation3], 1
    %758 = vsyncpa [#allocation6], 1
    %759 = vsyncpa [#allocation9], 1
    %760 = vsyncpa [#allocation4], 1

</llo_original>
